<compile_context>
chip_gen: v7x
topology: tpu7x:2x2x1
jax: 0.10.0
libtpu: 0.0.40
codegen_flags: <defaults>
</compile_context>

<pallas_src>
import math

import jax
import jax.numpy as jnp
from jax.experimental import pallas as pl
from jax.experimental.pallas import tpu as pltpu


def _round_up(x: int, m: int) -> int:
    return ((x + m - 1) // m) * m


def _cdiv(a: int, b: int) -> int:
    return (a + b - 1) // b


def _pad2d(x, rows, cols, dtype):
    x = x.astype(dtype)
    pr, pc = rows - x.shape[0], cols - x.shape[1]
    if pr == 0 and pc == 0:
        return x
    return jnp.pad(x, ((0, pr), (0, pc)))


# ---------------------------------------------------------------------------
# Tiling plan: pad rows to multiples of 8, contraction/lane dim to multiples
# of 128, and fit tm/tk to that padded N (minimal zero padding).
# ---------------------------------------------------------------------------
def _plan_rows(n: int, tm_target: int):
    n8 = _round_up(n, 8)
    grid_m = max(1, _cdiv(n8, tm_target))
    # v7x has 2 TensorCores sharding the "parallel" row axis: keep >= 2 tiles.
    if grid_m == 1 and n8 >= 16:
        grid_m = 2
    tm = _round_up(_cdiv(n8, grid_m), 8)
    return tm, tm * grid_m, grid_m


def _plan_cols(n: int, tk_target: int):
    n128 = _round_up(n, 128)
    grid_k = max(1, _cdiv(n128, tk_target))
    tk = _round_up(_cdiv(n128, grid_k), 128)
    return tk, tk * grid_k, grid_k


# ---------------------------------------------------------------------------
# Stage 1: support = h_0 @ W   (row-tiled, W resident across the grid)
# ---------------------------------------------------------------------------
def _support_kernel(h_ref, w_ref, s_ref):
    s_ref[...] = jnp.dot(
        h_ref[...], w_ref[...], preferred_element_type=jnp.float32
    ).astype(s_ref.dtype)


def _compute_support(h_p, w_p, support_dtype):
    n_rows, f_in_pad = h_p.shape
    f_pad = w_p.shape[1]
    # Small fixed row tile, decoupled from the stage-2 contraction tile (tk),
    # so a large tk cannot blow the scoped-VMEM limit here.  n_rows is always
    # a multiple of 128, so 128 divides it; use 256 when possible.
    tile_rows = 256 if n_rows % 256 == 0 else 128
    return pl.pallas_call(
        _support_kernel,
        out_shape=jax.ShapeDtypeStruct((n_rows, f_pad), support_dtype),
        grid=(n_rows // tile_rows,),
        in_specs=[
            pl.BlockSpec((tile_rows, f_in_pad), lambda i: (i, 0)),
            pl.BlockSpec((f_in_pad, f_pad), lambda i: (0, 0)),  # W resident
        ],
        out_specs=pl.BlockSpec((tile_rows, f_pad), lambda i: (i, 0)),
        compiler_params=pltpu.CompilerParams(
            dimension_semantics=("parallel",)
        ),
    )(h_p, w_p)


# ---------------------------------------------------------------------------
# Stage 2: output = adj @ support   (tiled (rows, k); f32 VMEM accumulator)
# ---------------------------------------------------------------------------
def _make_aggregate_kernel(tk: int, resident: bool):
    def kernel(adj_ref, s_ref, out_ref, acc_ref):
        k = pl.program_id(1)

        @pl.when(k == 0)
        def _():
            acc_ref[...] = jnp.zeros_like(acc_ref)

        if resident:
            # Full support lives in VMEM (loaded once); take this step's
            # contraction slice.
            start = pl.multiple_of(k * tk, 128)
            s = s_ref[pl.ds(start, tk), :]
        else:
            s = s_ref[...]

        a = adj_ref[...]
        if a.dtype != s.dtype:
            # e.g. bf16 adj (halves the dominant N^2 HBM stream) against f32
            # support -> promote adj; MXU is nowhere near saturation here.
            a = a.astype(s.dtype)
        acc_ref[...] += jnp.dot(a, s, preferred_element_type=jnp.float32)

        @pl.when(k == pl.num_programs(1) - 1)
        def _():
            out_ref[...] = acc_ref[...].astype(out_ref.dtype)

    return kernel


def _aggregate(adj_p, support_p, *, tm, tk, grid_m, grid_k, out_dtype,
               resident):
    n_pad_m, n_pad_k = adj_p.shape
    f_pad = support_p.shape[1]
    if resident:
        # Constant block index -> DMA'd once, stays resident for the whole grid.
        s_spec = pl.BlockSpec((n_pad_k, f_pad), lambda i, k: (0, 0))
    else:
        s_spec = pl.BlockSpec((tk, f_pad), lambda i, k: (k, 0))
    return pl.pallas_call(
        _make_aggregate_kernel(tk, resident),
        out_shape=jax.ShapeDtypeStruct((n_pad_m, f_pad), out_dtype),
        grid=(grid_m, grid_k),  # reduction axis last
        in_specs=[
            pl.BlockSpec((tm, tk), lambda i, k: (i, k)),  # adj tile (hot stream)
            s_spec,
        ],
        out_specs=pl.BlockSpec((tm, f_pad), lambda i, k: (i, 0)),
        scratch_shapes=[pltpu.VMEM((tm, f_pad), jnp.float32)],
        compiler_params=pltpu.CompilerParams(
            dimension_semantics=("parallel", "arbitrary")
        ),
    )(adj_p, support_p)


# ---------------------------------------------------------------------------
# Public API
# ---------------------------------------------------------------------------
def prepare_adj(adj_adjust, *, tm=512, tk=1024, adj_dtype=jnp.bfloat16):
    """Cast + pad the adjacency ONCE (cache it across layers / steps).

    The result can be passed to `simple_gcn_forward` in place of the raw
    (N, N) adjacency; the forward pass detects the prepared layout and skips
    its own cast/pad (which otherwise moves ~3x the kernel's adj HBM bytes).
    """
    n = adj_adjust.shape[0]
    assert adj_adjust.shape == (n, n)
    _, n_pad_m, _ = _plan_rows(n, tm)
    _, n_pad_k, _ = _plan_cols(n, tk)
    return _pad2d(adj_adjust, n_pad_m, n_pad_k, adj_dtype)


def simple_gcn_forward(h_0, weight, adj_adjust, *, tm=512, tk=1024,
                       adj_dtype=jnp.bfloat16, support_dtype=jnp.float32,
                       support_resident=None, vmem_budget_bytes=12 << 20):
    """Fused GCN layer: adj_adjust @ (h_0 @ weight).

    h_0:        (N, F_in)
    weight:     (F_in, F_out)
    adj_adjust: (N, N) raw, OR the pre-cast/pre-padded output of prepare_adj()
    returns:    (N, F_out) in h_0.dtype
    """
    n, f_in = h_0.shape
    f_in_w, f_out = weight.shape
    assert f_in_w == f_in
    out_dtype = h_0.dtype

    # (8,128)-friendly padded sizes; tiles fitted to the minimally padded N.
    f_in_pad = _round_up(f_in, 128)
    f_pad = _round_up(f_out, 128)          # lane-dense output stores
    tm, n_pad_m, grid_m = _plan_rows(n, tm)
    tk, n_pad_k, grid_k = _plan_cols(n, tk)

    # adj: reuse a prepared (pre-cast, pre-padded) adjacency if provided.
    if adj_adjust.shape == (n_pad_m, n_pad_k) and adj_adjust.dtype == adj_dtype:
        adj_p = adj_adjust
    else:
        assert adj_adjust.shape == (n, n)
        adj_p = _pad2d(adj_adjust, n_pad_m, n_pad_k, adj_dtype)

    # Stage-1 inputs stay in support_dtype (f32 by default) -> support is only
    # rounded (if at all) by support_dtype; its HBM traffic is negligible.
    h_p = _pad2d(h_0, n_pad_k, f_in_pad, support_dtype)
    w_p = _pad2d(weight, f_in_pad, f_pad, support_dtype)

    # Decide whether the whole support fits the stage-2 VMEM budget
    # (12 MiB default: safe under the 16 MiB v5e scoped default; v6e/v7x have
    # 32 MiB scoped so this is conservative everywhere).
    if support_resident is None:
        adj_b = jnp.dtype(adj_dtype).itemsize
        sup_b = jnp.dtype(support_dtype).itemsize
        out_b = jnp.dtype(out_dtype).itemsize
        fixed = (2 * tm * tk * adj_b          # adj, double-buffered
                 + 2 * tm * f_pad * out_b     # out, double-buffered
                 + tm * f_pad * 4)            # f32 accumulator scratch
        support_resident = (fixed + 2 * n_pad_k * f_pad * sup_b
                            <= vmem_budget_bytes)

    # Stage 1: support computed once.
    support_p = _compute_support(h_p, w_p, support_dtype)
    # Stage 2: adjacency aggregation — the only hot loop.
    out_p = _aggregate(adj_p, support_p, tm=tm, tk=tk,
                       grid_m=grid_m, grid_k=grid_k,
                       out_dtype=out_dtype, resident=support_resident)

    return out_p[:n, :f_out]


def init_gcn_weight(key, in_features, out_features, dtype=jnp.float32):
    # Matches SimpleGCN.reset_parameters: uniform(-stdv, stdv),
    # stdv = 1/sqrt(out_features)
    stdv = 1.0 / math.sqrt(out_features)
    return jax.random.uniform(
        key, (in_features, out_features), dtype=dtype, minval=-stdv, maxval=stdv
    )


if __name__ == "__main__":
    key = jax.random.PRNGKey(0)
    k_w, k_h, k_a, k_w2, k_h2, k_a2 = jax.random.split(key, 6)

    # --- Case 1/2: small shapes implied by the module -----------------------
    N, F_IN, F_OUT = 16, 32, 32
    weight = init_gcn_weight(k_w, F_IN, F_OUT)
    h_0 = jax.random.normal(k_h, (N, F_IN), dtype=jnp.float32)
    adj_adjust = jax.random.normal(k_a, (N, N), dtype=jnp.float32)
    ref = adj_adjust @ (h_0 @ weight)

    # 1) Full-f32 path: tight tolerance validates tiling / accumulator.
    out_f32 = jax.block_until_ready(simple_gcn_forward(
        h_0, weight, adj_adjust,
        adj_dtype=jnp.float32, support_dtype=jnp.float32))
    assert out_f32.shape == (N, F_OUT)
    assert jnp.allclose(out_f32, ref, atol=1e-4, rtol=1e-4)

    # 2) Default path: bf16 adj (cast/padded ONCE via prepare_adj and reused),
    #    f32 support -> only rounding is adj->bf16.
    adj_prepared = prepare_adj(adj_adjust)          # cacheable across layers
    out = jax.block_until_ready(simple_gcn_forward(h_0, weight, adj_prepared))
    assert out.shape == (N, F_OUT)
    assert jnp.allclose(out, ref, atol=5e-2, rtol=5e-2)

    # --- Case 3: multi-tile rows + multi-tile contraction, ragged F dims ----
    N2, F_IN2, F_OUT2 = 192, 48, 24
    w2 = init_gcn_weight(k_w2, F_IN2, F_OUT2)
    h2 = jax.random.normal(k_h2, (N2, F_IN2), dtype=jnp.float32)
    a2 = jax.random.normal(k_a2, (N2, N2), dtype=jnp.float32)
    ref2 = a2 @ (h2 @ w2)

    # Resident-support path with >1 k-tile (exercises in-VMEM k slicing).
    out2 = jax.block_until_ready(simple_gcn_forward(
        h2, w2, a2, tm=64, tk=128,
        adj_dtype=jnp.float32, support_dtype=jnp.float32))
    assert out2.shape == (N2, F_OUT2)
    assert jnp.allclose(out2, ref2, atol=1e-3, rtol=1e-3)

    # Forced streaming-support fallback (the path used when support would not
    # fit the VMEM budget on very large graphs).
    out2_stream = jax.block_until_ready(simple_gcn_forward(
        h2, w2, a2, tm=64, tk=128,
        adj_dtype=jnp.float32, support_dtype=jnp.float32,
        support_resident=False))
    assert jnp.allclose(out2_stream, ref2, atol=1e-3, rtol=1e-3)

    print("KERNEL_OK")
</pallas_src>

<mosaic_0001>
module attributes {stable_mosaic.version = 11 : i64} {
  func.func @_support_kernel(%arg0: i32, %arg1: memref<128x128xf32, #tpu.memory_space<vmem>>, %arg2: memref<128x128xf32, #tpu.memory_space<vmem>>, %arg3: memref<128x128xf32, #tpu.memory_space<vmem>>) attributes {dimension_semantics = [#tpu.dimension_semantics<parallel>], iteration_bounds = array<i64: 1>, scalar_prefetch = 0 : i64, scratch_operands = 0 : i64, tpu.core_type = #tpu.core_type<tc>, window_params = [{transform_indices = @transform_0, window_bounds = array<i64: 128, 128>}, {pipeline_mode = #tpu.pipeline_mode<synchronous>, transform_indices = @transform_1, window_bounds = array<i64: 128, 128>}, {transform_indices = @transform_2, window_bounds = array<i64: 128, 128>}]} {
    %c0 = arith.constant 0 : index
    %c0_0 = arith.constant 0 : index
    %0 = vector.load %arg1[%c0, %c0_0] : memref<128x128xf32, #tpu.memory_space<vmem>>, vector<128x128xf32>
    %c0_1 = arith.constant 0 : index
    %c0_2 = arith.constant 0 : index
    %1 = vector.load %arg2[%c0_1, %c0_2] : memref<128x128xf32, #tpu.memory_space<vmem>>, vector<128x128xf32>
    %cst = arith.constant dense<0.000000e+00> : vector<128x128xf32>
    %2 = tpu.matmul %0, %1, %cst {dimension_numbers = #tpu.dot_dimension_numbers<[1], [0], [0], [1], [0, 0, 1, 1], [], []>} : vector<128x128xf32>, vector<128x128xf32>, vector<128x128xf32> -> vector<128x128xf32>
    %c0_3 = arith.constant 0 : index
    %c0_4 = arith.constant 0 : index
    %3 = vector.load %arg3[%c0_3, %c0_4] : memref<128x128xf32, #tpu.memory_space<vmem>>, vector<128x128xf32>
    tpu.vector_store %arg3[%c0_3, %c0_4], %2 {strides = array<i32>} : memref<128x128xf32, #tpu.memory_space<vmem>>, vector<128x128xf32>,
    return
  }
  func.func @transform_0(%arg0: i32) -> (i32, i32) {
    %c0_i32 = arith.constant 0 : i32
    %c0_i32_0 = arith.constant 0 : i32
    return %arg0, %c0_i32 : i32, i32
  }
  func.func @transform_1(%arg0: i32) -> (i32, i32) {
    %c0_i32 = arith.constant 0 : i32
    %c0_i32_0 = arith.constant 0 : i32
    %c0_i32_1 = arith.constant 0 : i32
    return %c0_i32, %c0_i32_0 : i32, i32
  }
  func.func @transform_2(%arg0: i32) -> (i32, i32) {
    %c0_i32 = arith.constant 0 : i32
    %c0_i32_0 = arith.constant 0 : i32
    return %arg0, %c0_i32 : i32, i32
  }
}

</mosaic_0001>

<llo_original>
// kernel: tpu_custom_call.1
$region0: #{tpu_custom_call.1}
  #allocation0 [shape = 'u32[]', space=smem, size = 0x4, offset = 0x4, fixed_abs, tag = 'smem constant byte address 0x4 - core index']
  #allocation1 [shape = 'u32[144,128]{1,0:T(1,128)}', space=vmem, size = 0x12000, scoped, tag = 'internal scratch']
  %s0 = inlined_call_operand.hbm [shape: f32[128,128], index: 0, kind: input, shape index: {}]
  %s1 = inlined_call_operand.hbm [shape: f32[128,128], index: 1, kind: input, shape index: {}]
  %s2 = inlined_call_operand.hbm [shape: f32[128,128], index: 2, kind: output, shape index: {}]
  %s3 = sld [smem:[#allocation0]]
  $region26: #{tpu_custom_call.1} parent=0
    _
  %s5 = ssub.s32 1, %s3
  %s6 = scalar_select 0, %s5, %s3
  $region1: #{tpu_custom_call.1} parent=0
    #allocation2 [shape = 'u8[65536]{0}', space=vmem, size = 0x10000, scoped, tag = 'input window, operand 0, single buffered']
    #allocation3 [shape = 's32[1]{0}', space=sflag, size = 0x4, scoped, tag = 'scoped memory for tpu_custom_call.1']
    #allocation4 [shape = 's32[1]{0}', space=sflag, size = 0x4, scoped, tag = 'scoped memory for tpu_custom_call.1']
    #allocation5 [shape = 'u8[65536]{0}', space=vmem, size = 0x10000, scoped, tag = 'input window, operand 1, single buffered']
    #allocation6 [shape = 's32[1]{0}', space=sflag, size = 0x4, scoped, tag = 'scoped memory for tpu_custom_call.1']
    #allocation7 [shape = 'u8[65536]{0}', space=vmem, size = 0x10000, scoped, tag = 'output window, operand 0, single buffered']
    %7 = vsyncpa [#allocation3], 0
    %8 = vsyncpa [#allocation6], 0
    %9 = vsyncpa [#allocation4], 0
    // Predicated region
    $region2: #{tpu_custom_call.1} parent=1 // pred_check
      _
    $region3: #{tpu_custom_call.1} parent=1 // pred_check_branch
      %11 = sbr.rel (0) target = $region5
    $region4: #{tpu_custom_call.1} parent=1 // pred_region
      %s13 = ssub.s32 2048, 2048
      %14 = vsyncadd [#allocation3], %s13
      %s15 = sshll.u32 [#allocation2], 4
      %s16 = int_to_ptr.vmem [resolvable:$true] %s15
      %21 = dma.hbm_to_vmem [thread:$0]  %s0, 2048, %s16, [#allocation3], 128, 128, 8
    $region5: #{tpu_custom_call.1} parent=1 // pred_fallthru
      _
    // Predicated region
    $region6: #{tpu_custom_call.1} parent=1 // pred_check
      _
    $region7: #{tpu_custom_call.1} parent=1 // pred_check_branch
      %23 = sbr.rel (0) target = $region9
    $region8: #{tpu_custom_call.1} parent=1 // pred_region
      %s25 = ssub.s32 2048, 2048
      %26 = vsyncadd [#allocation6], %s25
      %s27 = sshll.u32 [#allocation5], 4
      %s28 = int_to_ptr.vmem [resolvable:$true] %s27
      %33 = dma.hbm_to_vmem [thread:$0]  %s1, 2048, %s28, [#allocation6], 128, 128, 8
    $region9: #{tpu_custom_call.1} parent=1 // pred_fallthru
      _
    // Predicated region
    $region10: #{tpu_custom_call.1} parent=1 // pred_check
      _
    $region11: #{tpu_custom_call.1} parent=1 // pred_check_branch
      %35 = sbr.rel (0) target = $region13
    $region12: #{tpu_custom_call.1} parent=1 // pred_region
      %36 = dma.done [#allocation3], 2048
    $region13: #{tpu_custom_call.1} parent=1 // pred_fallthru
      _
    // Predicated region
    $region14: #{tpu_custom_call.1} parent=1 // pred_check
      _
    $region15: #{tpu_custom_call.1} parent=1 // pred_check_branch
      %38 = sbr.rel (0) target = $region17
    $region16: #{tpu_custom_call.1} parent=1 // pred_region
      %39 = dma.done [#allocation6], 2048
    $region17: #{tpu_custom_call.1} parent=1 // pred_fallthru
      _
    %v40 = vld [vmem:[#allocation2] sm:$0xff]
    %v41 = vld [vmem:[#allocation2 + $0x8] sm:$0xff]
    %v42 = vld [vmem:[#allocation2 + $0x10] sm:$0xff]
    %v43 = vld [vmem:[#allocation2 + $0x18] sm:$0xff]
    %v44 = vld [vmem:[#allocation2 + $0x20] sm:$0xff]
    %v45 = vld [vmem:[#allocation2 + $0x28] sm:$0xff]
    %v46 = vld [vmem:[#allocation2 + $0x30] sm:$0xff]
    %v47 = vld [vmem:[#allocation2 + $0x38] sm:$0xff]
    %v48 = vld [vmem:[#allocation2 + $0x40] sm:$0xff]
    %v49 = vld [vmem:[#allocation2 + $0x48] sm:$0xff]
    %v50 = vld [vmem:[#allocation2 + $0x50] sm:$0xff]
    %v51 = vld [vmem:[#allocation2 + $0x58] sm:$0xff]
    %v52 = vld [vmem:[#allocation2 + $0x60] sm:$0xff]
    %v53 = vld [vmem:[#allocation2 + $0x68] sm:$0xff]
    %v54 = vld [vmem:[#allocation2 + $0x70] sm:$0xff]
    %v55 = vld [vmem:[#allocation2 + $0x78] sm:$0xff]
    %v56 = vld [vmem:[#allocation5] sm:$0xff]
    %v57 = vld [vmem:[#allocation5 + $0x8] sm:$0xff]
    %v58 = vld [vmem:[#allocation5 + $0x10] sm:$0xff]
    %v59 = vld [vmem:[#allocation5 + $0x18] sm:$0xff]
    %v60 = vld [vmem:[#allocation5 + $0x20] sm:$0xff]
    %v61 = vld [vmem:[#allocation5 + $0x28] sm:$0xff]
    %v62 = vld [vmem:[#allocation5 + $0x30] sm:$0xff]
    %v63 = vld [vmem:[#allocation5 + $0x38] sm:$0xff]
    %v64 = vld [vmem:[#allocation5 + $0x40] sm:$0xff]
    %v65 = vld [vmem:[#allocation5 + $0x48] sm:$0xff]
    %v66 = vld [vmem:[#allocation5 + $0x50] sm:$0xff]
    %v67 = vld [vmem:[#allocation5 + $0x58] sm:$0xff]
    %v68 = vld [vmem:[#allocation5 + $0x60] sm:$0xff]
    %v69 = vld [vmem:[#allocation5 + $0x68] sm:$0xff]
    %v70 = vld [vmem:[#allocation5 + $0x70] sm:$0xff]
    %v71 = vld [vmem:[#allocation5 + $0x78] sm:$0xff]
    %72 = vmatprep.subr.mxu0 0.0
    %73 = vmatpush1.msra.mxu0 %v56
    %74 = vmatprep.subr.mxu0 0.0
    %75 = vmatpush1.msra.mxu0 %v57
    %76 = vmatprep.subr.mxu0 0.0
    %77 = vmatpush1.msra.mxu0 %v58
    %78 = vmatprep.subr.mxu0 0.0
    %79 = vmatpush1.msra.mxu0 %v59
    %80 = vmatprep.subr.mxu0 0.0
    %81 = vmatpush1.msra.mxu0 %v60
    %82 = vmatprep.subr.mxu0 0.0
    %83 = vmatpush1.msra.mxu0 %v61
    %84 = vmatprep.subr.mxu0 0.0
    %85 = vmatpush1.msra.mxu0 %v62
    %86 = vmatprep.subr.mxu0 0.0
    %87 = vmatpush1.msra.mxu0 %v63
    %88 = vmatprep.subr.mxu0 0.0
    %89 = vmatpush1.msra.mxu0 %v64
    %90 = vmatprep.subr.mxu0 0.0
    %91 = vmatpush1.msra.mxu0 %v65
    %92 = vmatprep.subr.mxu0 0.0
    %93 = vmatpush1.msra.mxu0 %v66
    %94 = vmatprep.subr.mxu0 0.0
    %95 = vmatpush1.msra.mxu0 %v67
    %96 = vmatprep.subr.mxu0 0.0
    %97 = vmatpush1.msra.mxu0 %v68
    %98 = vmatprep.subr.mxu0 0.0
    %99 = vmatpush1.msra.mxu0 %v69
    %100 = vmatprep.subr.mxu0 0.0
    %101 = vmatpush1.msra.mxu0 %v70
    %102 = vmatprep.subr.mxu0 0.0
    %103 = vmatpush1.msra.mxu0 %v71
    %104 = vmatprep.subr.mxu0 0.0
    %105 = vmatpush1.msra.mxu0 0.0
    %106 = vmatprep.subr.mxu0 0.0
    %107 = vmatpush1.msra.mxu0 0.0
    %108 = vmatprep.subr.mxu0 0.0
    %109 = vmatpush1.msra.mxu0 0.0
    %110 = vmatprep.subr.mxu0 0.0
    %111 = vmatpush1.msra.mxu0 0.0
    %112 = vmatprep.subr.mxu0 0.0
    %113 = vmatpush1.msra.mxu0 0.0
    %114 = vmatprep.subr.mxu0 0.0
    %115 = vmatpush1.msra.mxu0 0.0
    %116 = vmatprep.subr.mxu0 0.0
    %117 = vmatpush1.msra.mxu0 0.0
    %118 = vmatprep.subr.mxu0 0.0
    %119 = vmatpush1.msra.mxu0 0.0
    %120 = vmatprep.subr.mxu0 0.0
    %121 = vmatpush1.msra.mxu0 0.0
    %122 = vmatprep.subr.mxu0 0.0
    %123 = vmatpush1.msra.mxu0 0.0
    %124 = vmatprep.subr.mxu0 0.0
    %125 = vmatpush1.msra.mxu0 0.0
    %126 = vmatprep.subr.mxu0 0.0
    %127 = vmatpush1.msra.mxu0 0.0
    %128 = vmatprep.subr.mxu0 0.0
    %129 = vmatpush1.msra.mxu0 0.0
    %130 = vmatprep.subr.mxu0 0.0
    %131 = vmatpush1.msra.mxu0 0.0
    %132 = vmatprep.subr.mxu0 0.0
    %133 = vmatpush1.msra.mxu0 0.0
    %134 = vmatprep.subr.mxu0 0.0
    %135 = vmatpush1.msra.mxu0 0.0
    %136 = vmatprep.mubr.f32.mxu0 0.0
    %137 = vmatmul.mubr.f32.gmra.mrb[0].mxu0 %v40
    %v138 = vpop.f32.mrb[0].mxu0
    %v139 = vadd.f32 0.0, %v138
    %v140 = vpop.f32.mrb[0].mxu0
    %141 = vmatprep.mubr.f32.mxu0 0.0
    %142 = vmatmul.mubr.f32.gmra.mrb[0].mxu0 %v41
    %v143 = vpop.f32.mrb[0].mxu0
    %v144 = vadd.f32 0.0, %v143
    %v145 = vpop.f32.mrb[0].mxu0
    %146 = vmatprep.mubr.f32.mxu0 0.0
    %147 = vmatmul.mubr.f32.gmra.mrb[0].mxu0 %v42
    %v148 = vpop.f32.mrb[0].mxu0
    %v149 = vadd.f32 0.0, %v148
    %v150 = vpop.f32.mrb[0].mxu0
    %151 = vmatprep.mubr.f32.mxu0 0.0
    %152 = vmatmul.mubr.f32.gmra.mrb[0].mxu0 %v43
    %v153 = vpop.f32.mrb[0].mxu0
    %v154 = vadd.f32 0.0, %v153
    %v155 = vpop.f32.mrb[0].mxu0
    %156 = vmatprep.mubr.f32.mxu0 0.0
    %157 = vmatmul.mubr.f32.gmra.mrb[0].mxu0 %v44
    %v158 = vpop.f32.mrb[0].mxu0
    %v159 = vadd.f32 0.0, %v158
    %v160 = vpop.f32.mrb[0].mxu0
    %161 = vmatprep.mubr.f32.mxu0 0.0
    %162 = vmatmul.mubr.f32.gmra.mrb[0].mxu0 %v45
    %v163 = vpop.f32.mrb[0].mxu0
    %v164 = vadd.f32 0.0, %v163
    %v165 = vpop.f32.mrb[0].mxu0
    %166 = vmatprep.mubr.f32.mxu0 0.0
    %167 = vmatmul.mubr.f32.gmra.mrb[0].mxu0 %v46
    %v168 = vpop.f32.mrb[0].mxu0
    %v169 = vadd.f32 0.0, %v168
    %v170 = vpop.f32.mrb[0].mxu0
    %171 = vmatprep.mubr.f32.mxu0 0.0
    %172 = vmatmul.mubr.f32.gmra.mrb[0].mxu0 %v47
    %v173 = vpop.f32.mrb[0].mxu0
    %v174 = vadd.f32 0.0, %v173
    %v175 = vpop.f32.mrb[0].mxu0
    %176 = vmatprep.mubr.f32.mxu0 0.0
    %177 = vmatmul.mubr.f32.gmra.mrb[0].mxu0 %v48
    %v178 = vpop.f32.mrb[0].mxu0
    %v179 = vadd.f32 0.0, %v178
    %v180 = vpop.f32.mrb[0].mxu0
    %181 = vmatprep.mubr.f32.mxu0 0.0
    %182 = vmatmul.mubr.f32.gmra.mrb[0].mxu0 %v49
    %v183 = vpop.f32.mrb[0].mxu0
    %v184 = vadd.f32 0.0, %v183
    %v185 = vpop.f32.mrb[0].mxu0
    %186 = vmatprep.mubr.f32.mxu0 0.0
    %187 = vmatmul.mubr.f32.gmra.mrb[0].mxu0 %v50
    %v188 = vpop.f32.mrb[0].mxu0
    %v189 = vadd.f32 0.0, %v188
    %v190 = vpop.f32.mrb[0].mxu0
    %191 = vmatprep.mubr.f32.mxu0 0.0
    %192 = vmatmul.mubr.f32.gmra.mrb[0].mxu0 %v51
    %v193 = vpop.f32.mrb[0].mxu0
    %v194 = vadd.f32 0.0, %v193
    %v195 = vpop.f32.mrb[0].mxu0
    %196 = vmatprep.mubr.f32.mxu0 0.0
    %197 = vmatmul.mubr.f32.gmra.mrb[0].mxu0 %v52
    %v198 = vpop.f32.mrb[0].mxu0
    %v199 = vadd.f32 0.0, %v198
    %v200 = vpop.f32.mrb[0].mxu0
    %201 = vmatprep.mubr.f32.mxu0 0.0
    %202 = vmatmul.mubr.f32.gmra.mrb[0].mxu0 %v53
    %v203 = vpop.f32.mrb[0].mxu0
    %v204 = vadd.f32 0.0, %v203
    %v205 = vpop.f32.mrb[0].mxu0
    %206 = vmatprep.mubr.f32.mxu0 0.0
    %207 = vmatmul.mubr.f32.gmra.mrb[0].mxu0 %v54
    %v208 = vpop.f32.mrb[0].mxu0
    %v209 = vadd.f32 0.0, %v208
    %v210 = vpop.f32.mrb[0].mxu0
    %211 = vmatprep.mubr.f32.mxu0 0.0
    %212 = vmatmul.mubr.f32.gmra.mrb[0].mxu0 %v55
    %v213 = vpop.f32.mrb[0].mxu0
    %v214 = vadd.f32 0.0, %v213
    %v215 = vpop.f32.mrb[0].mxu0
    %216 = vdwg.mxu0
    %217 = vst [vmem:[#allocation7] sm:$0xff] %v139
    %218 = vst [vmem:[#allocation7 + $0x8] sm:$0xff] %v144
    %219 = vst [vmem:[#allocation7 + $0x10] sm:$0xff] %v149
    %220 = vst [vmem:[#allocation7 + $0x18] sm:$0xff] %v154
    %221 = vst [vmem:[#allocation7 + $0x20] sm:$0xff] %v159
    %222 = vst [vmem:[#allocation7 + $0x28] sm:$0xff] %v164
    %223 = vst [vmem:[#allocation7 + $0x30] sm:$0xff] %v169
    %224 = vst [vmem:[#allocation7 + $0x38] sm:$0xff] %v174
    %225 = vst [vmem:[#allocation7 + $0x40] sm:$0xff] %v179
    %226 = vst [vmem:[#allocation7 + $0x48] sm:$0xff] %v184
    %227 = vst [vmem:[#allocation7 + $0x50] sm:$0xff] %v189
    %228 = vst [vmem:[#allocation7 + $0x58] sm:$0xff] %v194
    %229 = vst [vmem:[#allocation7 + $0x60] sm:$0xff] %v199
    %230 = vst [vmem:[#allocation7 + $0x68] sm:$0xff] %v204
    %231 = vst [vmem:[#allocation7 + $0x70] sm:$0xff] %v209
    %232 = vst [vmem:[#allocation7 + $0x78] sm:$0xff] %v214
    // Predicated region
    $region18: #{tpu_custom_call.1} parent=1 // pred_check
      _
    $region19: #{tpu_custom_call.1} parent=1 // pred_check_branch
      %234 = sbr.rel (0) target = $region21
    $region20: #{tpu_custom_call.1} parent=1 // pred_region
      %s236 = ssub.s32 2048, 2048
      %237 = vsyncadd [#allocation4], %s236
      %s238 = sshll.u32 [#allocation7], 4
      %s239 = int_to_ptr.vmem [resolvable:$true] %s238
      %244 = dma.vmem_to_hbm [thread:$0]  %s239, 2048, %s2, [#allocation4], 128, 128, 8
    $region21: #{tpu_custom_call.1} parent=1 // pred_fallthru
      _
    // Predicated region
    $region22: #{tpu_custom_call.1} parent=1 // pred_check
      _
    $region23: #{tpu_custom_call.1} parent=1 // pred_check_branch
      %246 = sbr.rel (0) target = $region25
    $region24: #{tpu_custom_call.1} parent=1 // pred_region
      %247 = dma.done [#allocation4], 2048
    $region25: #{tpu_custom_call.1} parent=1 // pred_fallthru
      _
    %248 = vsyncpa [#allocation3], 1
    %249 = vsyncpa [#allocation6], 1
    %250 = vsyncpa [#allocation4], 1

</llo_original>
